<compile_context>
chip_gen: v7x
topology: tpu7x:2x2x1
jax: 0.10.0
libtpu: 0.0.40
codegen_flags: <defaults>
</compile_context>

<pallas_src>
import jax
import jax.numpy as jnp
from jax.experimental import pallas as pl
from jax.experimental.pallas import tpu as pltpu

CHANNELS = [8, 32, 64, 64, 128, 128, 256, 128]
N_LAYERS = len(CHANNELS) - 1  # 7
DEFAULT_TM = 1024             # batch tile; sweep 512-4096 on real workloads


def _round_up(x, m):
    return (x + m - 1) // m * m


def linear_encoder_kernel(x_ref, *refs):
    """refs = (w_0..w_{L-1}, b_0..b_{L-1}, out_ref).

    w_i: (C_in_i, C_out_i) bf16 in VMEM (resident), b_i: (1, C_out_i) f32 in VMEM.
    x_ref: (TM, C_in) bf16 tile.  Computes h <- relu(h @ w_i + b_i) per layer.
    """
    w_refs = refs[:N_LAYERS]
    b_refs = refs[N_LAYERS:2 * N_LAYERS]
    out_ref = refs[2 * N_LAYERS]

    h = x_ref[...]                                  # bf16 (TM, 8)
    for i in range(N_LAYERS):                       # unrolled: full LLO visibility
        acc = jnp.dot(h, w_refs[i][...],            # bf16 x bf16 -> f32 on the MXU
                      preferred_element_type=jnp.float32)
        acc = jnp.maximum(acc + b_refs[i][...], 0.0)  # bias + ReLU in f32 (VPU)
        if i + 1 < N_LAYERS:
            h = acc.astype(jnp.bfloat16)            # bf16 operand for next matmul
        else:
            out_ref[...] = acc.astype(out_ref.dtype)


def linear_encoder(x, weights, biases, *, tm=DEFAULT_TM):
    """x: (N, CHANNELS[0]) f32. weights[i]: (C_in, C_out) f32. biases[i]: (1, C_out) f32."""
    n = x.shape[0]
    c_in, c_out = CHANNELS[0], CHANNELS[-1]

    # Batch tile: keep it a multiple of 16 (bf16 sublane packing); pad N to a
    # tile multiple so the grid divides evenly.  Padded rows are sliced off.
    tm = min(tm, _round_up(n, 16))
    n_pad = _round_up(n, tm)

    x_bf16 = x.astype(jnp.bfloat16)
    if n_pad != n:
        x_bf16 = jnp.pad(x_bf16, ((0, n_pad - n), (0, 0)))
    w_bf16 = [w.astype(jnp.bfloat16) for w in weights]

    grid = (n_pad // tm,)

    in_specs = [pl.BlockSpec((tm, c_in), lambda i: (i, 0))]
    # Weights / biases: whole-array blocks, constant index_map -> fetched once,
    # stay resident in VMEM across all grid steps.
    for w in w_bf16:
        in_specs.append(pl.BlockSpec(w.shape, lambda i: (0, 0)))
    for b in biases:
        in_specs.append(pl.BlockSpec(b.shape, lambda i: (0, 0)))
    out_specs = pl.BlockSpec((tm, c_out), lambda i: (i, 0))

    flops = 2 * n_pad * sum(CHANNELS[i] * CHANNELS[i + 1] for i in range(N_LAYERS))
    weight_bytes = sum(int(w.size) * 2 for w in w_bf16) + sum(int(b.size) * 4 for b in biases)
    bytes_accessed = n_pad * c_in * 2 + n_pad * c_out * 4 + weight_bytes

    out = pl.pallas_call(
        linear_encoder_kernel,
        out_shape=jax.ShapeDtypeStruct((n_pad, c_out), jnp.float32),
        grid=grid,
        in_specs=in_specs,
        out_specs=out_specs,
        compiler_params=pltpu.CompilerParams(
            dimension_semantics=("parallel",)),
        cost_estimate=pl.CostEstimate(
            flops=flops, transcendentals=0, bytes_accessed=bytes_accessed),
    )(x_bf16, *w_bf16, *biases)

    return out[:n] if n_pad != n else out


def init_params(key):
    """Deterministic init mimicking nn.Linear default (U(-1/sqrt(fan_in), +1/sqrt(fan_in)))."""
    weights, biases = [], []
    for i in range(N_LAYERS):
        c_in, c_out = CHANNELS[i], CHANNELS[i + 1]
        key, kw, kb = jax.random.split(key, 3)
        bound = 1.0 / jnp.sqrt(jnp.float32(c_in))
        # Stored pre-transposed: (c_in, c_out) == W.T of PyTorch's (c_out, c_in).
        w = jax.random.uniform(kw, (c_in, c_out), jnp.float32, -bound, bound)
        b = jax.random.uniform(kb, (1, c_out), jnp.float32, -bound, bound)
        weights.append(w)
        biases.append(b)
    return weights, biases


def reference_forward(x, weights, biases, *, bf16_operands=True):
    """Pure-JAX reference.  bf16_operands=True mirrors the kernel's MXU dtypes."""
    h = x.astype(jnp.bfloat16) if bf16_operands else x
    n = len(weights)
    for i, (w, b) in enumerate(zip(weights, biases)):
        w_ = w.astype(jnp.bfloat16) if bf16_operands else w
        acc = jnp.dot(h, w_, preferred_element_type=jnp.float32) + b
        acc = jnp.maximum(acc, 0.0)
        h = acc.astype(jnp.bfloat16) if (bf16_operands and i + 1 < n) else acc
    return h.astype(jnp.float32)


if __name__ == "__main__":
    key = jax.random.PRNGKey(0)
    key, kx = jax.random.split(key)

    batch = 32
    x = jax.random.uniform(kx, (batch, CHANNELS[0]), jnp.float32)

    weights, biases = init_params(key)

    out = linear_encoder(x, weights, biases)
    out = jax.block_until_ready(out)

    assert out.shape == (batch, CHANNELS[-1]), out.shape

    # Compare against a reference that uses the same bf16 matmul operands.
    ref_bf16 = reference_forward(x, weights, biases, bf16_operands=True)
    assert jnp.allclose(out, ref_bf16, atol=1e-2, rtol=1e-2), "mismatch vs bf16 reference"

    # Sanity check against the full-f32 reference (loose: bf16 operand rounding).
    ref_f32 = reference_forward(x, weights, biases, bf16_operands=False)
    assert jnp.allclose(out, ref_f32, atol=1e-1, rtol=1e-1), "mismatch vs f32 reference"

    print("KERNEL_OK")
</pallas_src>

<mosaic_0001>
module attributes {stable_mosaic.version = 11 : i64} {
  func.func @linear_encoder_kernel(%arg0: i32, %arg1: memref<32x8xbf16, #tpu.memory_space<vmem>>, %arg2: memref<8x32xbf16, #tpu.memory_space<vmem>>, %arg3: memref<32x64xbf16, #tpu.memory_space<vmem>>, %arg4: memref<64x64xbf16, #tpu.memory_space<vmem>>, %arg5: memref<64x128xbf16, #tpu.memory_space<vmem>>, %arg6: memref<128x128xbf16, #tpu.memory_space<vmem>>, %arg7: memref<128x256xbf16, #tpu.memory_space<vmem>>, %arg8: memref<256x128xbf16, #tpu.memory_space<vmem>>, %arg9: memref<1x32xf32, #tpu.memory_space<vmem>>, %arg10: memref<1x64xf32, #tpu.memory_space<vmem>>, %arg11: memref<1x64xf32, #tpu.memory_space<vmem>>, %arg12: memref<1x128xf32, #tpu.memory_space<vmem>>, %arg13: memref<1x128xf32, #tpu.memory_space<vmem>>, %arg14: memref<1x256xf32, #tpu.memory_space<vmem>>, %arg15: memref<1x128xf32, #tpu.memory_space<vmem>>, %arg16: memref<32x128xf32, #tpu.memory_space<vmem>>) attributes {dimension_semantics = [#tpu.dimension_semantics<parallel>], iteration_bounds = array<i64: 1>, scalar_prefetch = 0 : i64, scratch_operands = 0 : i64, tpu.core_type = #tpu.core_type<tc>, window_params = [{transform_indices = @transform_0, window_bounds = array<i64: 32, 8>}, {pipeline_mode = #tpu.pipeline_mode<synchronous>, transform_indices = @transform_1, window_bounds = array<i64: 8, 32>}, {pipeline_mode = #tpu.pipeline_mode<synchronous>, transform_indices = @transform_2, window_bounds = array<i64: 32, 64>}, {pipeline_mode = #tpu.pipeline_mode<synchronous>, transform_indices = @transform_3, window_bounds = array<i64: 64, 64>}, {pipeline_mode = #tpu.pipeline_mode<synchronous>, transform_indices = @transform_4, window_bounds = array<i64: 64, 128>}, {pipeline_mode = #tpu.pipeline_mode<synchronous>, transform_indices = @transform_5, window_bounds = array<i64: 128, 128>}, {pipeline_mode = #tpu.pipeline_mode<synchronous>, transform_indices = @transform_6, window_bounds = array<i64: 128, 256>}, {pipeline_mode = #tpu.pipeline_mode<synchronous>, transform_indices = @transform_7, window_bounds = array<i64: 256, 128>}, {pipeline_mode = #tpu.pipeline_mode<synchronous>, transform_indices = @transform_8, window_bounds = array<i64: 1, 32>}, {pipeline_mode = #tpu.pipeline_mode<synchronous>, transform_indices = @transform_9, window_bounds = array<i64: 1, 64>}, {pipeline_mode = #tpu.pipeline_mode<synchronous>, transform_indices = @transform_10, window_bounds = array<i64: 1, 64>}, {pipeline_mode = #tpu.pipeline_mode<synchronous>, transform_indices = @transform_11, window_bounds = array<i64: 1, 128>}, {pipeline_mode = #tpu.pipeline_mode<synchronous>, transform_indices = @transform_12, window_bounds = array<i64: 1, 128>}, {pipeline_mode = #tpu.pipeline_mode<synchronous>, transform_indices = @transform_13, window_bounds = array<i64: 1, 256>}, {pipeline_mode = #tpu.pipeline_mode<synchronous>, transform_indices = @transform_14, window_bounds = array<i64: 1, 128>}, {transform_indices = @transform_15, window_bounds = array<i64: 32, 128>}]} {
    %c0 = arith.constant 0 : index
    %c0_0 = arith.constant 0 : index
    %0 = vector.load %arg1[%c0, %c0_0] : memref<32x8xbf16, #tpu.memory_space<vmem>>, vector<32x8xbf16>
    %c0_1 = arith.constant 0 : index
    %c0_2 = arith.constant 0 : index
    %1 = vector.load %arg2[%c0_1, %c0_2] : memref<8x32xbf16, #tpu.memory_space<vmem>>, vector<8x32xbf16>
    %cst = arith.constant dense<0.000000e+00> : vector<32x32xf32>
    %2 = tpu.matmul %0, %1, %cst {dimension_numbers = #tpu.dot_dimension_numbers<[1], [0], [0], [1], [0, 0, 1, 1], [], []>} : vector<32x8xbf16>, vector<8x32xbf16>, vector<32x32xf32> -> vector<32x32xf32>
    %c0_3 = arith.constant 0 : index
    %c0_4 = arith.constant 0 : index
    %3 = vector.load %arg9[%c0_3, %c0_4] : memref<1x32xf32, #tpu.memory_space<vmem>>, vector<1x32xf32>
    %4 = vector.broadcast %3 : vector<1x32xf32> to vector<32x32xf32>
    %5 = arith.addf %2, %4 : vector<32x32xf32>
    %cst_5 = arith.constant 0.000000e+00 : f32
    %6 = vector.broadcast %cst_5 : f32 to vector<32x32xf32>
    %7 = arith.maximumf %5, %6 : vector<32x32xf32>
    %8 = arith.truncf %7 : vector<32x32xf32> to vector<32x32xbf16>
    %c0_6 = arith.constant 0 : index
    %c0_7 = arith.constant 0 : index
    %9 = vector.load %arg3[%c0_6, %c0_7] : memref<32x64xbf16, #tpu.memory_space<vmem>>, vector<32x64xbf16>
    %cst_8 = arith.constant dense<0.000000e+00> : vector<32x64xf32>
    %10 = tpu.matmul %8, %9, %cst_8 {dimension_numbers = #tpu.dot_dimension_numbers<[1], [0], [0], [1], [0, 0, 1, 1], [], []>} : vector<32x32xbf16>, vector<32x64xbf16>, vector<32x64xf32> -> vector<32x64xf32>
    %c0_9 = arith.constant 0 : index
    %c0_10 = arith.constant 0 : index
    %11 = vector.load %arg10[%c0_9, %c0_10] : memref<1x64xf32, #tpu.memory_space<vmem>>, vector<1x64xf32>
    %12 = vector.broadcast %11 : vector<1x64xf32> to vector<32x64xf32>
    %13 = arith.addf %10, %12 : vector<32x64xf32>
    %cst_11 = arith.constant 0.000000e+00 : f32
    %14 = vector.broadcast %cst_11 : f32 to vector<32x64xf32>
    %15 = arith.maximumf %13, %14 : vector<32x64xf32>
    %16 = arith.truncf %15 : vector<32x64xf32> to vector<32x64xbf16>
    %c0_12 = arith.constant 0 : index
    %c0_13 = arith.constant 0 : index
    %17 = vector.load %arg4[%c0_12, %c0_13] : memref<64x64xbf16, #tpu.memory_space<vmem>>, vector<64x64xbf16>
    %cst_14 = arith.constant dense<0.000000e+00> : vector<32x64xf32>
    %18 = tpu.matmul %16, %17, %cst_14 {dimension_numbers = #tpu.dot_dimension_numbers<[1], [0], [0], [1], [0, 0, 1, 1], [], []>} : vector<32x64xbf16>, vector<64x64xbf16>, vector<32x64xf32> -> vector<32x64xf32>
    %c0_15 = arith.constant 0 : index
    %c0_16 = arith.constant 0 : index
    %19 = vector.load %arg11[%c0_15, %c0_16] : memref<1x64xf32, #tpu.memory_space<vmem>>, vector<1x64xf32>
    %20 = vector.broadcast %19 : vector<1x64xf32> to vector<32x64xf32>
    %21 = arith.addf %18, %20 : vector<32x64xf32>
    %cst_17 = arith.constant 0.000000e+00 : f32
    %22 = vector.broadcast %cst_17 : f32 to vector<32x64xf32>
    %23 = arith.maximumf %21, %22 : vector<32x64xf32>
    %24 = arith.truncf %23 : vector<32x64xf32> to vector<32x64xbf16>
    %c0_18 = arith.constant 0 : index
    %c0_19 = arith.constant 0 : index
    %25 = vector.load %arg5[%c0_18, %c0_19] : memref<64x128xbf16, #tpu.memory_space<vmem>>, vector<64x128xbf16>
    %cst_20 = arith.constant dense<0.000000e+00> : vector<32x128xf32>
    %26 = tpu.matmul %24, %25, %cst_20 {dimension_numbers = #tpu.dot_dimension_numbers<[1], [0], [0], [1], [0, 0, 1, 1], [], []>} : vector<32x64xbf16>, vector<64x128xbf16>, vector<32x128xf32> -> vector<32x128xf32>
    %c0_21 = arith.constant 0 : index
    %c0_22 = arith.constant 0 : index
    %27 = vector.load %arg12[%c0_21, %c0_22] : memref<1x128xf32, #tpu.memory_space<vmem>>, vector<1x128xf32>
    %28 = vector.broadcast %27 : vector<1x128xf32> to vector<32x128xf32>
    %29 = arith.addf %26, %28 : vector<32x128xf32>
    %cst_23 = arith.constant 0.000000e+00 : f32
    %30 = vector.broadcast %cst_23 : f32 to vector<32x128xf32>
    %31 = arith.maximumf %29, %30 : vector<32x128xf32>
    %32 = arith.truncf %31 : vector<32x128xf32> to vector<32x128xbf16>
    %c0_24 = arith.constant 0 : index
    %c0_25 = arith.constant 0 : index
    %33 = vector.load %arg6[%c0_24, %c0_25] : memref<128x128xbf16, #tpu.memory_space<vmem>>, vector<128x128xbf16>
    %cst_26 = arith.constant dense<0.000000e+00> : vector<32x128xf32>
    %34 = tpu.matmul %32, %33, %cst_26 {dimension_numbers = #tpu.dot_dimension_numbers<[1], [0], [0], [1], [0, 0, 1, 1], [], []>} : vector<32x128xbf16>, vector<128x128xbf16>, vector<32x128xf32> -> vector<32x128xf32>
    %c0_27 = arith.constant 0 : index
    %c0_28 = arith.constant 0 : index
    %35 = vector.load %arg13[%c0_27, %c0_28] : memref<1x128xf32, #tpu.memory_space<vmem>>, vector<1x128xf32>
    %36 = vector.broadcast %35 : vector<1x128xf32> to vector<32x128xf32>
    %37 = arith.addf %34, %36 : vector<32x128xf32>
    %cst_29 = arith.constant 0.000000e+00 : f32
    %38 = vector.broadcast %cst_29 : f32 to vector<32x128xf32>
    %39 = arith.maximumf %37, %38 : vector<32x128xf32>
    %40 = arith.truncf %39 : vector<32x128xf32> to vector<32x128xbf16>
    %c0_30 = arith.constant 0 : index
    %c0_31 = arith.constant 0 : index
    %41 = vector.load %arg7[%c0_30, %c0_31] : memref<128x256xbf16, #tpu.memory_space<vmem>>, vector<128x256xbf16>
    %cst_32 = arith.constant dense<0.000000e+00> : vector<32x256xf32>
    %42 = tpu.matmul %40, %41, %cst_32 {dimension_numbers = #tpu.dot_dimension_numbers<[1], [0], [0], [1], [0, 0, 1, 1], [], []>} : vector<32x128xbf16>, vector<128x256xbf16>, vector<32x256xf32> -> vector<32x256xf32>
    %c0_33 = arith.constant 0 : index
    %c0_34 = arith.constant 0 : index
    %43 = vector.load %arg14[%c0_33, %c0_34] : memref<1x256xf32, #tpu.memory_space<vmem>>, vector<1x256xf32>
    %44 = vector.broadcast %43 : vector<1x256xf32> to vector<32x256xf32>
    %45 = arith.addf %42, %44 : vector<32x256xf32>
    %cst_35 = arith.constant 0.000000e+00 : f32
    %46 = vector.broadcast %cst_35 : f32 to vector<32x256xf32>
    %47 = arith.maximumf %45, %46 : vector<32x256xf32>
    %48 = arith.truncf %47 : vector<32x256xf32> to vector<32x256xbf16>
    %c0_36 = arith.constant 0 : index
    %c0_37 = arith.constant 0 : index
    %49 = vector.load %arg8[%c0_36, %c0_37] : memref<256x128xbf16, #tpu.memory_space<vmem>>, vector<256x128xbf16>
    %cst_38 = arith.constant dense<0.000000e+00> : vector<32x128xf32>
    %50 = tpu.matmul %48, %49, %cst_38 {dimension_numbers = #tpu.dot_dimension_numbers<[1], [0], [0], [1], [0, 0, 1, 1], [], []>} : vector<32x256xbf16>, vector<256x128xbf16>, vector<32x128xf32> -> vector<32x128xf32>
    %c0_39 = arith.constant 0 : index
    %c0_40 = arith.constant 0 : index
    %51 = vector.load %arg15[%c0_39, %c0_40] : memref<1x128xf32, #tpu.memory_space<vmem>>, vector<1x128xf32>
    %52 = vector.broadcast %51 : vector<1x128xf32> to vector<32x128xf32>
    %53 = arith.addf %50, %52 : vector<32x128xf32>
    %cst_41 = arith.constant 0.000000e+00 : f32
    %54 = vector.broadcast %cst_41 : f32 to vector<32x128xf32>
    %55 = arith.maximumf %53, %54 : vector<32x128xf32>
    %c0_42 = arith.constant 0 : index
    %c0_43 = arith.constant 0 : index
    %56 = vector.load %arg16[%c0_42, %c0_43] : memref<32x128xf32, #tpu.memory_space<vmem>>, vector<32x128xf32>
    tpu.vector_store %arg16[%c0_42, %c0_43], %55 {strides = array<i32>} : memref<32x128xf32, #tpu.memory_space<vmem>>, vector<32x128xf32>,
    return
  }
  func.func @transform_0(%arg0: i32) -> (i32, i32) {
    %c0_i32 = arith.constant 0 : i32
    %c0_i32_0 = arith.constant 0 : i32
    return %arg0, %c0_i32 : i32, i32
  }
  func.func @transform_1(%arg0: i32) -> (i32, i32) {
    %c0_i32 = arith.constant 0 : i32
    %c0_i32_0 = arith.constant 0 : i32
    %c0_i32_1 = arith.constant 0 : i32
    return %c0_i32, %c0_i32_0 : i32, i32
  }
  func.func @transform_2(%arg0: i32) -> (i32, i32) {
    %c0_i32 = arith.constant 0 : i32
    %c0_i32_0 = arith.constant 0 : i32
    %c0_i32_1 = arith.constant 0 : i32
    return %c0_i32, %c0_i32_0 : i32, i32
  }
  func.func @transform_3(%arg0: i32) -> (i32, i32) {
    %c0_i32 = arith.constant 0 : i32
    %c0_i32_0 = arith.constant 0 : i32
    %c0_i32_1 = arith.constant 0 : i32
    return %c0_i32, %c0_i32_0 : i32, i32
  }
  func.func @transform_4(%arg0: i32) -> (i32, i32) {
    %c0_i32 = arith.constant 0 : i32
    %c0_i32_0 = arith.constant 0 : i32
    %c0_i32_1 = arith.constant 0 : i32
    return %c0_i32, %c0_i32_0 : i32, i32
  }
  func.func @transform_5(%arg0: i32) -> (i32, i32) {
    %c0_i32 = arith.constant 0 : i32
    %c0_i32_0 = arith.constant 0 : i32
    %c0_i32_1 = arith.constant 0 : i32
    return %c0_i32, %c0_i32_0 : i32, i32
  }
  func.func @transform_6(%arg0: i32) -> (i32, i32) {
    %c0_i32 = arith.constant 0 : i32
    %c0_i32_0 = arith.constant 0 : i32
    %c0_i32_1 = arith.constant 0 : i32
    return %c0_i32, %c0_i32_0 : i32, i32
  }
  func.func @transform_7(%arg0: i32) -> (i32, i32) {
    %c0_i32 = arith.constant 0 : i32
    %c0_i32_0 = arith.constant 0 : i32
    %c0_i32_1 = arith.constant 0 : i32
    return %c0_i32, %c0_i32_0 : i32, i32
  }
  func.func @transform_8(%arg0: i32) -> (i32, i32) {
    %c0_i32 = arith.constant 0 : i32
    %c0_i32_0 = arith.constant 0 : i32
    %c0_i32_1 = arith.constant 0 : i32
    return %c0_i32, %c0_i32_0 : i32, i32
  }
  func.func @transform_9(%arg0: i32) -> (i32, i32) {
    %c0_i32 = arith.constant 0 : i32
    %c0_i32_0 = arith.constant 0 : i32
    %c0_i32_1 = arith.constant 0 : i32
    return %c0_i32, %c0_i32_0 : i32, i32
  }
  func.func @transform_10(%arg0: i32) -> (i32, i32) {
    %c0_i32 = arith.constant 0 : i32
    %c0_i32_0 = arith.constant 0 : i32
    %c0_i32_1 = arith.constant 0 : i32
    return %c0_i32, %c0_i32_0 : i32, i32
  }
  func.func @transform_11(%arg0: i32) -> (i32, i32) {
    %c0_i32 = arith.constant 0 : i32
    %c0_i32_0 = arith.constant 0 : i32
    %c0_i32_1 = arith.constant 0 : i32
    return %c0_i32, %c0_i32_0 : i32, i32
  }
  func.func @transform_12(%arg0: i32) -> (i32, i32) {
    %c0_i32 = arith.constant 0 : i32
    %c0_i32_0 = arith.constant 0 : i32
    %c0_i32_1 = arith.constant 0 : i32
    return %c0_i32, %c0_i32_0 : i32, i32
  }
  func.func @transform_13(%arg0: i32) -> (i32, i32) {
    %c0_i32 = arith.constant 0 : i32
    %c0_i32_0 = arith.constant 0 : i32
    %c0_i32_1 = arith.constant 0 : i32
    return %c0_i32, %c0_i32_0 : i32, i32
  }
  func.func @transform_14(%arg0: i32) -> (i32, i32) {
    %c0_i32 = arith.constant 0 : i32
    %c0_i32_0 = arith.constant 0 : i32
    %c0_i32_1 = arith.constant 0 : i32
    return %c0_i32, %c0_i32_0 : i32, i32
  }
  func.func @transform_15(%arg0: i32) -> (i32, i32) {
    %c0_i32 = arith.constant 0 : i32
    %c0_i32_0 = arith.constant 0 : i32
    return %arg0, %c0_i32 : i32, i32
  }
}

</mosaic_0001>

<llo_original>
// kernel: tpu_custom_call.1
$region0: #{tpu_custom_call.1}
  #allocation0 [shape = 'u32[]', space=smem, size = 0x4, offset = 0x4, fixed_abs, tag = 'smem constant byte address 0x4 - core index']
  #allocation1 [shape = 'u32[144,128]{1,0:T(1,128)}', space=vmem, size = 0x12000, scoped, tag = 'internal scratch']
  %s0 = inlined_call_operand.vmem [shape: bf16[32,8], index: 0, kind: input, shape index: {}]
  %s1 = inlined_call_operand.hbm [shape: bf16[8,32], index: 1, kind: input, shape index: {}]
  %s2 = inlined_call_operand.hbm [shape: bf16[32,64], index: 2, kind: input, shape index: {}]
  %s3 = inlined_call_operand.hbm [shape: bf16[64,64], index: 3, kind: input, shape index: {}]
  %s4 = inlined_call_operand.vmem [shape: bf16[64,128], index: 4, kind: input, shape index: {}]
  %s5 = inlined_call_operand.hbm [shape: bf16[128,128], index: 5, kind: input, shape index: {}]
  %s6 = inlined_call_operand.hbm [shape: bf16[128,256], index: 6, kind: input, shape index: {}]
  %s7 = inlined_call_operand.hbm [shape: bf16[256,128], index: 7, kind: input, shape index: {}]
  %s8 = inlined_call_operand.vmem [shape: f32[1,32], index: 8, kind: input, shape index: {}]
  %s9 = inlined_call_operand.vmem [shape: f32[1,64], index: 9, kind: input, shape index: {}]
  %s10 = inlined_call_operand.vmem [shape: f32[1,64], index: 10, kind: input, shape index: {}]
  %s11 = inlined_call_operand.vmem [shape: f32[1,128], index: 11, kind: input, shape index: {}]
  %s12 = inlined_call_operand.vmem [shape: f32[1,128], index: 12, kind: input, shape index: {}]
  %s13 = inlined_call_operand.vmem [shape: f32[1,256], index: 13, kind: input, shape index: {}]
  %s14 = inlined_call_operand.vmem [shape: f32[1,128], index: 14, kind: input, shape index: {}]
  %s15 = inlined_call_operand.hbm [shape: f32[32,128], index: 15, kind: output, shape index: {}]
  %s16 = sld [smem:[#allocation0]]
  $region94: #{tpu_custom_call.1} parent=0
    _
  %s18 = ssub.s32 1, %s16
  %s19 = scalar_select 0, %s18, %s16
  $region1: #{tpu_custom_call.1} parent=0
    #allocation2 [shape = 'u8[2048]{0}', space=vmem, size = 0x800, scoped, tag = 'input window, operand 1, single buffered']
    #allocation3 [shape = 's32[1]{0}', space=sflag, size = 0x4, scoped, tag = 'scoped memory for tpu_custom_call.1']
    #allocation4 [shape = 's32[1]{0}', space=sflag, size = 0x4, scoped, tag = 'scoped memory for tpu_custom_call.1']
    #allocation5 [shape = 'u8[8192]{0}', space=vmem, size = 0x2000, scoped, tag = 'input window, operand 2, single buffered']
    #allocation6 [shape = 's32[1]{0}', space=sflag, size = 0x4, scoped, tag = 'scoped memory for tpu_custom_call.1']
    #allocation7 [shape = 'u8[16384]{0}', space=vmem, size = 0x4000, scoped, tag = 'input window, operand 3, single buffered']
    #allocation8 [shape = 'u8[32768]{0}', space=vmem, size = 0x8000, scoped, tag = 'input window, operand 5, single buffered']
    #allocation9 [shape = 's32[1]{0}', space=sflag, size = 0x4, scoped, tag = 'scoped memory for tpu_custom_call.1']
    #allocation10 [shape = 'u8[65536]{0}', space=vmem, size = 0x10000, scoped, tag = 'input window, operand 6, single buffered']
    #allocation11 [shape = 'u8[65536]{0}', space=vmem, size = 0x10000, scoped, tag = 'input window, operand 7, single buffered']
    #allocation12 [shape = 's32[1]{0}', space=sflag, size = 0x4, scoped, tag = 'scoped memory for tpu_custom_call.1']
    #allocation13 [shape = 'u8[16384]{0}', space=vmem, size = 0x4000, scoped, tag = 'output window, operand 0, single buffered']
    %20 = vsyncpa [#allocation3], 0
    %21 = vsyncpa [#allocation6], 0
    %22 = vsyncpa [#allocation9], 0
    %23 = vsyncpa [#allocation12], 0
    %24 = vsyncpa [#allocation4], 0
    // Predicated region
    $region2: #{tpu_custom_call.1} parent=1 // pred_check
      _
    $region3: #{tpu_custom_call.1} parent=1 // pred_check_branch
      %26 = sbr.rel (0) target = $region5
    $region4: #{tpu_custom_call.1} parent=1 // pred_region
      _
    $region5: #{tpu_custom_call.1} parent=1 // pred_fallthru
      _
    // Predicated region
    $region6: #{tpu_custom_call.1} parent=1 // pred_check
      _
    $region7: #{tpu_custom_call.1} parent=1 // pred_check_branch
      %28 = sbr.rel (0) target = $region9
    $region8: #{tpu_custom_call.1} parent=1 // pred_region
      %s30 = ssub.s32 64, 64
      %31 = vsyncadd [#allocation3], %s30
      %s33 = sshll.u32 [#allocation2], 4
      %s34 = int_to_ptr.vmem [resolvable:$true] %s33
      %36 = dma.hbm_to_vmem [thread:$0]  %s1, 64, %s34, [#allocation3]
    $region9: #{tpu_custom_call.1} parent=1 // pred_fallthru
      _
    // Predicated region
    $region10: #{tpu_custom_call.1} parent=1 // pred_check
      _
    $region11: #{tpu_custom_call.1} parent=1 // pred_check_branch
      %38 = sbr.rel (0) target = $region13
    $region12: #{tpu_custom_call.1} parent=1 // pred_region
      %s40 = ssub.s32 256, 256
      %41 = vsyncadd [#allocation6], %s40
      %s42 = sshll.u32 [#allocation5], 4
      %s43 = int_to_ptr.vmem [resolvable:$true] %s42
      %48 = dma.hbm_to_vmem [thread:$0]  %s2, 256, %s43, [#allocation6], 64, 64, 4
    $region13: #{tpu_custom_call.1} parent=1 // pred_fallthru
      _
    // Predicated region
    $region14: #{tpu_custom_call.1} parent=1 // pred_check
      _
    $region15: #{tpu_custom_call.1} parent=1 // pred_check_branch
      %50 = sbr.rel (0) target = $region17
    $region16: #{tpu_custom_call.1} parent=1 // pred_region
      %s52 = ssub.s32 512, 512
      %53 = vsyncadd [#allocation6], %s52
      %s54 = sshll.u32 [#allocation7], 4
      %s55 = int_to_ptr.vmem [resolvable:$true] %s54
      %60 = dma.hbm_to_vmem [thread:$0]  %s3, 512, %s55, [#allocation6], 64, 64, 4
    $region17: #{tpu_custom_call.1} parent=1 // pred_fallthru
      _
    // Predicated region
    $region18: #{tpu_custom_call.1} parent=1 // pred_check
      _
    $region19: #{tpu_custom_call.1} parent=1 // pred_check_branch
      %62 = sbr.rel (0) target = $region21
    $region20: #{tpu_custom_call.1} parent=1 // pred_region
      _
    $region21: #{tpu_custom_call.1} parent=1 // pred_fallthru
      _
    // Predicated region
    $region22: #{tpu_custom_call.1} parent=1 // pred_check
      _
    $region23: #{tpu_custom_call.1} parent=1 // pred_check_branch
      %64 = sbr.rel (0) target = $region25
    $region24: #{tpu_custom_call.1} parent=1 // pred_region
      %s66 = ssub.s32 1024, 1024
      %67 = vsyncadd [#allocation9], %s66
      %s68 = sshll.u32 [#allocation8], 4
      %s69 = int_to_ptr.vmem [resolvable:$true] %s68
      %74 = dma.hbm_to_vmem [thread:$0]  %s5, 1024, %s69, [#allocation9], 64, 64, 4
    $region25: #{tpu_custom_call.1} parent=1 // pred_fallthru
      _
    // Predicated region
    $region26: #{tpu_custom_call.1} parent=1 // pred_check
      _
    $region27: #{tpu_custom_call.1} parent=1 // pred_check_branch
      %76 = sbr.rel (0) target = $region29
    $region28: #{tpu_custom_call.1} parent=1 // pred_region
      %s78 = ssub.s32 2048, 2048
      %79 = vsyncadd [#allocation9], %s78
      %s80 = sshll.u32 [#allocation10], 4
      %s81 = int_to_ptr.vmem [resolvable:$true] %s80
      %86 = dma.hbm_to_vmem [thread:$0]  %s6, 2048, %s81, [#allocation9], 128, 128, 8
    $region29: #{tpu_custom_call.1} parent=1 // pred_fallthru
      _
    // Predicated region
    $region30: #{tpu_custom_call.1} parent=1 // pred_check
      _
    $region31: #{tpu_custom_call.1} parent=1 // pred_check_branch
      %88 = sbr.rel (0) target = $region33
    $region32: #{tpu_custom_call.1} parent=1 // pred_region
      %s90 = ssub.s32 2048, 2048
      %91 = vsyncadd [#allocation12], %s90
      %s92 = sshll.u32 [#allocation11], 4
      %s93 = int_to_ptr.vmem [resolvable:$true] %s92
      %98 = dma.hbm_to_vmem [thread:$0]  %s7, 2048, %s93, [#allocation12], 64, 64, 4
    $region33: #{tpu_custom_call.1} parent=1 // pred_fallthru
      _
    // Predicated region
    $region34: #{tpu_custom_call.1} parent=1 // pred_check
      _
    $region35: #{tpu_custom_call.1} parent=1 // pred_check_branch
      %100 = sbr.rel (0) target = $region37
    $region36: #{tpu_custom_call.1} parent=1 // pred_region
      _
    $region37: #{tpu_custom_call.1} parent=1 // pred_fallthru
      _
    // Predicated region
    $region38: #{tpu_custom_call.1} parent=1 // pred_check
      _
    $region39: #{tpu_custom_call.1} parent=1 // pred_check_branch
      %102 = sbr.rel (0) target = $region41
    $region40: #{tpu_custom_call.1} parent=1 // pred_region
      _
    $region41: #{tpu_custom_call.1} parent=1 // pred_fallthru
      _
    // Predicated region
    $region42: #{tpu_custom_call.1} parent=1 // pred_check
      _
    $region43: #{tpu_custom_call.1} parent=1 // pred_check_branch
      %104 = sbr.rel (0) target = $region45
    $region44: #{tpu_custom_call.1} parent=1 // pred_region
      _
    $region45: #{tpu_custom_call.1} parent=1 // pred_fallthru
      _
    // Predicated region
    $region46: #{tpu_custom_call.1} parent=1 // pred_check
      _
    $region47: #{tpu_custom_call.1} parent=1 // pred_check_branch
      %106 = sbr.rel (0) target = $region49
    $region48: #{tpu_custom_call.1} parent=1 // pred_region
      _
    $region49: #{tpu_custom_call.1} parent=1 // pred_fallthru
      _
    // Predicated region
    $region50: #{tpu_custom_call.1} parent=1 // pred_check
      _
    $region51: #{tpu_custom_call.1} parent=1 // pred_check_branch
      %108 = sbr.rel (0) target = $region53
    $region52: #{tpu_custom_call.1} parent=1 // pred_region
      _
    $region53: #{tpu_custom_call.1} parent=1 // pred_fallthru
      _
    // Predicated region
    $region54: #{tpu_custom_call.1} parent=1 // pred_check
      _
    $region55: #{tpu_custom_call.1} parent=1 // pred_check_branch
      %110 = sbr.rel (0) target = $region57
    $region56: #{tpu_custom_call.1} parent=1 // pred_region
      _
    $region57: #{tpu_custom_call.1} parent=1 // pred_fallthru
      _
    // Predicated region
    $region58: #{tpu_custom_call.1} parent=1 // pred_check
      _
    $region59: #{tpu_custom_call.1} parent=1 // pred_check_branch
      %112 = sbr.rel (0) target = $region61
    $region60: #{tpu_custom_call.1} parent=1 // pred_region
      _
    $region61: #{tpu_custom_call.1} parent=1 // pred_fallthru
      _
    // Predicated region
    $region62: #{tpu_custom_call.1} parent=1 // pred_check
      _
    $region63: #{tpu_custom_call.1} parent=1 // pred_check_branch
      %114 = sbr.rel (0) target = $region65
    $region64: #{tpu_custom_call.1} parent=1 // pred_region
      %115 = dma.done [#allocation3], 64
    $region65: #{tpu_custom_call.1} parent=1 // pred_fallthru
      _
    // Predicated region
    $region66: #{tpu_custom_call.1} parent=1 // pred_check
      _
    $region67: #{tpu_custom_call.1} parent=1 // pred_check_branch
      %117 = sbr.rel (0) target = $region69
    $region68: #{tpu_custom_call.1} parent=1 // pred_region
      %118 = dma.done [#allocation6], 256
    $region69: #{tpu_custom_call.1} parent=1 // pred_fallthru
      _
    // Predicated region
    $region70: #{tpu_custom_call.1} parent=1 // pred_check
      _
    $region71: #{tpu_custom_call.1} parent=1 // pred_check_branch
      %120 = sbr.rel (0) target = $region73
    $region72: #{tpu_custom_call.1} parent=1 // pred_region
      %121 = dma.done [#allocation6], 512
    $region73: #{tpu_custom_call.1} parent=1 // pred_fallthru
      _
    // Predicated region
    $region74: #{tpu_custom_call.1} parent=1 // pred_check
      _
    $region75: #{tpu_custom_call.1} parent=1 // pred_check_branch
      %123 = sbr.rel (0) target = $region77
    $region76: #{tpu_custom_call.1} parent=1 // pred_region
      %124 = dma.done [#allocation9], 1024
    $region77: #{tpu_custom_call.1} parent=1 // pred_fallthru
      _
    // Predicated region
    $region78: #{tpu_custom_call.1} parent=1 // pred_check
      _
    $region79: #{tpu_custom_call.1} parent=1 // pred_check_branch
      %126 = sbr.rel (0) target = $region81
    $region80: #{tpu_custom_call.1} parent=1 // pred_region
      %127 = dma.done [#allocation9], 2048
    $region81: #{tpu_custom_call.1} parent=1 // pred_fallthru
      _
    // Predicated region
    $region82: #{tpu_custom_call.1} parent=1 // pred_check
      _
    $region83: #{tpu_custom_call.1} parent=1 // pred_check_branch
      %129 = sbr.rel (0) target = $region85
    $region84: #{tpu_custom_call.1} parent=1 // pred_region
      %130 = dma.done [#allocation12], 2048
    $region85: #{tpu_custom_call.1} parent=1 // pred_fallthru
      _
    %v132 = vld [vmem:[%s0] sm:$0xf]
    %v133 = vld [vmem:[%s0 + $0x4] sm:$0xf]
    %v134 = vld [vmem:[%s0 + $0x8] sm:$0xf]
    %v135 = vld [vmem:[%s0 + $0xc] sm:$0xf]
    %v136 = vld [vmem:[#allocation2] sm:$0xf]
    %v137 = vld [vmem:[%s8] sm:$0x1]
    %v139 = vlaneseq
    %v140 = vshrl.u32 %v139, 7
    %v141 = vsub.s32 0, %v140
    %v142 = vrot.slane %v137, %v141
    %v148 = vunpack.c.l.b16 %v132
    %v149 = vunpack.c.l.b16 %v133
    %v150 = vunpack.c.l.b16 %v134
    %v151 = vunpack.c.l.b16 %v135
    %v152 = vpack.c.b16 %v149, %v148
    %v153 = vpack.c.b16 %v151, %v150
    %vm154 = vcmask 64512
    %v156 = vsel %vm154, %v152, 0
    %v159 = vsel %vm154, %v153, 0
    %vm161 = vcmask 1043456
    %v163 = vsel %vm161, %v136, 0
    %165 = vmatprep.subr.bf16.mxu0 0
    %166 = vmatpush1.bf16.msra.mxu0 %v163
    %167 = vmatprep.subr.bf16.mxu0 0
    %168 = vmatpush1.bf16.msra.mxu0 0
    %169 = vmatprep.subr.bf16.mxu0 0
    %170 = vmatpush1.bf16.msra.mxu0 0
    %171 = vmatprep.subr.bf16.mxu0 0
    %172 = vmatpush1.bf16.msra.mxu0 0
    %173 = vmatprep.subr.bf16.mxu0 0
    %174 = vmatpush1.bf16.msra.mxu0 0
    %175 = vmatprep.subr.bf16.mxu0 0
    %176 = vmatpush1.bf16.msra.mxu0 0
    %177 = vmatprep.subr.bf16.mxu0 0
    %178 = vmatpush1.bf16.msra.mxu0 0
    %179 = vmatprep.subr.bf16.mxu0 0
    %180 = vmatpush1.bf16.msra.mxu0 0
    %181 = vmatprep.subr.bf16.mxu0 0
    %182 = vmatpush1.bf16.msra.mxu0 0
    %183 = vmatprep.subr.bf16.mxu0 0
    %184 = vmatpush1.bf16.msra.mxu0 0
    %185 = vmatprep.subr.bf16.mxu0 0
    %186 = vmatpush1.bf16.msra.mxu0 0
    %187 = vmatprep.subr.bf16.mxu0 0
    %188 = vmatpush1.bf16.msra.mxu0 0
    %189 = vmatprep.subr.bf16.mxu0 0
    %190 = vmatpush1.bf16.msra.mxu0 0
    %191 = vmatprep.subr.bf16.mxu0 0
    %192 = vmatpush1.bf16.msra.mxu0 0
    %193 = vmatprep.subr.bf16.mxu0 0
    %194 = vmatpush1.bf16.msra.mxu0 0
    %195 = vmatprep.subr.bf16.mxu0 0
    %196 = vmatpush1.bf16.msra.mxu0 0
    %197 = vmatprep.mubr.bf16.mxu0 0
    %198 = vmatmul.mubr.bf16.gmra.mrb[0].mxu0 %v156
    %v199 = vpop.f32.mrb[0].mxu0
    %v200 = vadd.f32 %v142, %v199
    %v201 = vpop.f32.mrb[0].mxu0
    %v202 = vpop.f32.mrb[0].mxu0
    %v203 = vadd.f32 %v142, %v202
    %v204 = vpop.f32.mrb[0].mxu0
    %205 = vmatprep.mubr.bf16.mxu0 0
    %206 = vmatmul.mubr.bf16.gmra.mrb[0].mxu0 %v159
    %v207 = vpop.f32.mrb[0].mxu0
    %v208 = vadd.f32 %v142, %v207
    %v209 = vpop.f32.mrb[0].mxu0
    %v210 = vpop.f32.mrb[0].mxu0
    %v211 = vadd.f32 %v142, %v210
    %v212 = vpop.f32.mrb[0].mxu0
    %213 = vdwg.mxu0
    %v214 = vmax.f32 %v200, 0.0
    %v215 = vmax.f32 %v203, 0.0
    %v216 = vmax.f32 %v208, 0.0
    %v217 = vmax.f32 %v211, 0.0
    %v218 = vpack.c.bf16 %v215, %v214
    %v219 = vpack.c.bf16 %v217, %v216
    %v220 = vld [vmem:[#allocation5] sm:$0xf]
    %v221 = vld [vmem:[#allocation5 + $0x4] sm:$0xf]
    %v222 = vld [vmem:[#allocation5 + $0x8] sm:$0xf]
    %v223 = vld [vmem:[#allocation5 + $0xc] sm:$0xf]
    %v224 = vld [vmem:[%s9] sm:$0x1]
    %v226 = vlaneseq
    %v227 = vshrl.u32 %v226, 7
    %v228 = vsub.s32 0, %v227
    %v229 = vrot.slane %v224, %v228
    %v235 = vunpack.c.l.b16 %v220
    %v236 = vunpack.c.l.b16 %v221
    %v237 = vunpack.c.l.b16 %v222
    %v238 = vunpack.c.l.b16 %v223
    %v239 = vpack.c.b16 %v236, %v235
    %v240 = vpack.c.b16 %v238, %v237
    %vm243 = vcmask 261120
    %v245 = vsel %vm243, %v218, 0
    %v248 = vsel %vm243, %v219, 0
    %250 = vmatprep.subr.bf16.mxu0 0
    %251 = vmatpush1.bf16.msra.mxu0 %v239
    %252 = vmatprep.subr.bf16.mxu0 0
    %253 = vmatpush1.bf16.msra.mxu0 %v240
    %254 = vmatprep.subr.bf16.mxu0 0
    %255 = vmatpush1.bf16.msra.mxu0 0
    %256 = vmatprep.subr.bf16.mxu0 0
    %257 = vmatpush1.bf16.msra.mxu0 0
    %258 = vmatprep.subr.bf16.mxu0 0
    %259 = vmatpush1.bf16.msra.mxu0 0
    %260 = vmatprep.subr.bf16.mxu0 0
    %261 = vmatpush1.bf16.msra.mxu0 0
    %262 = vmatprep.subr.bf16.mxu0 0
    %263 = vmatpush1.bf16.msra.mxu0 0
    %264 = vmatprep.subr.bf16.mxu0 0
    %265 = vmatpush1.bf16.msra.mxu0 0
    %266 = vmatprep.subr.bf16.mxu0 0
    %267 = vmatpush1.bf16.msra.mxu0 0
    %268 = vmatprep.subr.bf16.mxu0 0
    %269 = vmatpush1.bf16.msra.mxu0 0
    %270 = vmatprep.subr.bf16.mxu0 0
    %271 = vmatpush1.bf16.msra.mxu0 0
    %272 = vmatprep.subr.bf16.mxu0 0
    %273 = vmatpush1.bf16.msra.mxu0 0
    %274 = vmatprep.subr.bf16.mxu0 0
    %275 = vmatpush1.bf16.msra.mxu0 0
    %276 = vmatprep.subr.bf16.mxu0 0
    %277 = vmatpush1.bf16.msra.mxu0 0
    %278 = vmatprep.subr.bf16.mxu0 0
    %279 = vmatpush1.bf16.msra.mxu0 0
    %280 = vmatprep.subr.bf16.mxu0 0
    %281 = vmatpush1.bf16.msra.mxu0 0
    %282 = vmatprep.mubr.bf16.mxu0 0
    %283 = vmatmul.mubr.bf16.gmra.mrb[0].mxu0 %v245
    %v284 = vpop.f32.mrb[0].mxu0
    %v285 = vadd.f32 %v229, %v284
    %v286 = vpop.f32.mrb[0].mxu0
    %v287 = vpop.f32.mrb[0].mxu0
    %v288 = vadd.f32 %v229, %v287
    %v289 = vpop.f32.mrb[0].mxu0
    %290 = vmatprep.mubr.bf16.mxu0 0
    %291 = vmatmul.mubr.bf16.gmra.mrb[0].mxu0 %v248
    %v292 = vpop.f32.mrb[0].mxu0
    %v293 = vadd.f32 %v229, %v292
    %v294 = vpop.f32.mrb[0].mxu0
    %v295 = vpop.f32.mrb[0].mxu0
    %v296 = vadd.f32 %v229, %v295
    %v297 = vpop.f32.mrb[0].mxu0
    %298 = vdwg.mxu0
    %v299 = vmax.f32 %v285, 0.0
    %v300 = vmax.f32 %v288, 0.0
    %v301 = vmax.f32 %v293, 0.0
    %v302 = vmax.f32 %v296, 0.0
    %v303 = vpack.c.bf16 %v300, %v299
    %v304 = vpack.c.bf16 %v302, %v301
    %v305 = vld [vmem:[#allocation7] sm:$0xf]
    %v306 = vld [vmem:[#allocation7 + $0x4] sm:$0xf]
    %v307 = vld [vmem:[#allocation7 + $0x8] sm:$0xf]
    %v308 = vld [vmem:[#allocation7 + $0xc] sm:$0xf]
    %v309 = vld [vmem:[#allocation7 + $0x10] sm:$0xf]
    %v310 = vld [vmem:[#allocation7 + $0x14] sm:$0xf]
    %v311 = vld [vmem:[#allocation7 + $0x18] sm:$0xf]
    %v312 = vld [vmem:[#allocation7 + $0x1c] sm:$0xf]
    %v313 = vld [vmem:[%s10] sm:$0x1]
    %v315 = vlaneseq
    %v316 = vshrl.u32 %v315, 7
    %v317 = vsub.s32 0, %v316
    %v318 = vrot.slane %v313, %v317
    %v328 = vunpack.c.l.b16 %v305
    %v329 = vunpack.c.l.b16 %v306
    %v330 = vunpack.c.l.b16 %v307
    %v331 = vunpack.c.l.b16 %v308
    %v332 = vunpack.c.l.b16 %v309
    %v333 = vunpack.c.l.b16 %v310
    %v334 = vunpack.c.l.b16 %v311
    %v335 = vunpack.c.l.b16 %v312
    %v336 = vpack.c.b16 %v329, %v328
    %v337 = vpack.c.b16 %v331, %v330
    %v338 = vpack.c.b16 %v333, %v332
    %v339 = vpack.c.b16 %v335, %v334
    %vm344 = vcmask 523264
    %v346 = vsel %vm344, %v303, 0
    %v349 = vsel %vm344, %v304, 0
    %351 = vmatprep.subr.bf16.mxu0 0
    %352 = vmatpush1.bf16.msra.mxu0 %v336
    %353 = vmatprep.subr.bf16.mxu0 0
    %354 = vmatpush1.bf16.msra.mxu0 %v337
    %355 = vmatprep.subr.bf16.mxu0 0
    %356 = vmatpush1.bf16.msra.mxu0 %v338
    %357 = vmatprep.subr.bf16.mxu0 0
    %358 = vmatpush1.bf16.msra.mxu0 %v339
    %359 = vmatprep.subr.bf16.mxu0 0
    %360 = vmatpush1.bf16.msra.mxu0 0
    %361 = vmatprep.subr.bf16.mxu0 0
    %362 = vmatpush1.bf16.msra.mxu0 0
    %363 = vmatprep.subr.bf16.mxu0 0
    %364 = vmatpush1.bf16.msra.mxu0 0
    %365 = vmatprep.subr.bf16.mxu0 0
    %366 = vmatpush1.bf16.msra.mxu0 0
    %367 = vmatprep.subr.bf16.mxu0 0
    %368 = vmatpush1.bf16.msra.mxu0 0
    %369 = vmatprep.subr.bf16.mxu0 0
    %370 = vmatpush1.bf16.msra.mxu0 0
    %371 = vmatprep.subr.bf16.mxu0 0
    %372 = vmatpush1.bf16.msra.mxu0 0
    %373 = vmatprep.subr.bf16.mxu0 0
    %374 = vmatpush1.bf16.msra.mxu0 0
    %375 = vmatprep.subr.bf16.mxu0 0
    %376 = vmatpush1.bf16.msra.mxu0 0
    %377 = vmatprep.subr.bf16.mxu0 0
    %378 = vmatpush1.bf16.msra.mxu0 0
    %379 = vmatprep.subr.bf16.mxu0 0
    %380 = vmatpush1.bf16.msra.mxu0 0
    %381 = vmatprep.subr.bf16.mxu0 0
    %382 = vmatpush1.bf16.msra.mxu0 0
    %383 = vmatprep.mubr.bf16.mxu0 0
    %384 = vmatmul.mubr.bf16.gmra.mrb[0].mxu0 %v346
    %v385 = vpop.f32.mrb[0].mxu0
    %v386 = vadd.f32 %v318, %v385
    %v387 = vpop.f32.mrb[0].mxu0
    %v388 = vpop.f32.mrb[0].mxu0
    %v389 = vadd.f32 %v318, %v388
    %v390 = vpop.f32.mrb[0].mxu0
    %391 = vmatprep.mubr.bf16.mxu0 0
    %392 = vmatmul.mubr.bf16.gmra.mrb[0].mxu0 %v349
    %v393 = vpop.f32.mrb[0].mxu0
    %v394 = vadd.f32 %v318, %v393
    %v395 = vpop.f32.mrb[0].mxu0
    %v396 = vpop.f32.mrb[0].mxu0
    %v397 = vadd.f32 %v318, %v396
    %v398 = vpop.f32.mrb[0].mxu0
    %399 = vdwg.mxu0
    %v400 = vmax.f32 %v386, 0.0
    %v401 = vmax.f32 %v389, 0.0
    %v402 = vmax.f32 %v394, 0.0
    %v403 = vmax.f32 %v397, 0.0
    %v404 = vpack.c.bf16 %v401, %v400
    %v405 = vpack.c.bf16 %v403, %v402
    %v406 = vld [vmem:[%s4] sm:$0xf]
    %v407 = vld [vmem:[%s4 + $0x4] sm:$0xf]
    %v408 = vld [vmem:[%s4 + $0x8] sm:$0xf]
    %v409 = vld [vmem:[%s4 + $0xc] sm:$0xf]
    %v410 = vld [vmem:[%s4 + $0x10] sm:$0xf]
    %v411 = vld [vmem:[%s4 + $0x14] sm:$0xf]
    %v412 = vld [vmem:[%s4 + $0x18] sm:$0xf]
    %v413 = vld [vmem:[%s4 + $0x1c] sm:$0xf]
    %v414 = vld [vmem:[%s11] sm:$0x1]
    %v416 = vlaneseq
    %v417 = vshrl.u32 %v416, 7
    %v418 = vsub.s32 0, %v417
    %v419 = vrot.slane %v414, %v418
    %v429 = vunpack.c.l.b16 %v406
    %v430 = vunpack.c.l.b16 %v407
    %v431 = vunpack.c.l.b16 %v408
    %v432 = vunpack.c.l.b16 %v409
    %v433 = vunpack.c.l.b16 %v410
    %v434 = vunpack.c.l.b16 %v411
    %v435 = vunpack.c.l.b16 %v412
    %v436 = vunpack.c.l.b16 %v413
    %v437 = vpack.c.b16 %v430, %v429
    %v438 = vpack.c.b16 %v432, %v431
    %v439 = vpack.c.b16 %v434, %v433
    %v440 = vpack.c.b16 %v436, %v435
    %v446 = vsel %vm344, %v404, 0
    %v449 = vsel %vm344, %v405, 0
    %451 = vmatprep.subr.bf16.mxu0 0
    %452 = vmatpush1.bf16.msra.mxu0 %v437
    %453 = vmatprep.subr.bf16.mxu0 0
    %454 = vmatpush1.bf16.msra.mxu0 %v438
    %455 = vmatprep.subr.bf16.mxu0 0
    %456 = vmatpush1.bf16.msra.mxu0 %v439
    %457 = vmatprep.subr.bf16.mxu0 0
    %458 = vmatpush1.bf16.msra.mxu0 %v440
    %459 = vmatprep.subr.bf16.mxu0 0
    %460 = vmatpush1.bf16.msra.mxu0 0
    %461 = vmatprep.subr.bf16.mxu0 0
    %462 = vmatpush1.bf16.msra.mxu0 0
    %463 = vmatprep.subr.bf16.mxu0 0
    %464 = vmatpush1.bf16.msra.mxu0 0
    %465 = vmatprep.subr.bf16.mxu0 0
    %466 = vmatpush1.bf16.msra.mxu0 0
    %467 = vmatprep.subr.bf16.mxu0 0
    %468 = vmatpush1.bf16.msra.mxu0 0
    %469 = vmatprep.subr.bf16.mxu0 0
    %470 = vmatpush1.bf16.msra.mxu0 0
    %471 = vmatprep.subr.bf16.mxu0 0
    %472 = vmatpush1.bf16.msra.mxu0 0
    %473 = vmatprep.subr.bf16.mxu0 0
    %474 = vmatpush1.bf16.msra.mxu0 0
    %475 = vmatprep.subr.bf16.mxu0 0
    %476 = vmatpush1.bf16.msra.mxu0 0
    %477 = vmatprep.subr.bf16.mxu0 0
    %478 = vmatpush1.bf16.msra.mxu0 0
    %479 = vmatprep.subr.bf16.mxu0 0
    %480 = vmatpush1.bf16.msra.mxu0 0
    %481 = vmatprep.subr.bf16.mxu0 0
    %482 = vmatpush1.bf16.msra.mxu0 0
    %483 = vmatprep.mubr.bf16.mxu0 0
    %484 = vmatmul.mubr.bf16.gmra.mrb[0].mxu0 %v446
    %v485 = vpop.f32.mrb[0].mxu0
    %v486 = vadd.f32 %v419, %v485
    %v487 = vpop.f32.mrb[0].mxu0
    %v488 = vpop.f32.mrb[0].mxu0
    %v489 = vadd.f32 %v419, %v488
    %v490 = vpop.f32.mrb[0].mxu0
    %491 = vmatprep.mubr.bf16.mxu0 0
    %492 = vmatmul.mubr.bf16.gmra.mrb[0].mxu0 %v449
    %v493 = vpop.f32.mrb[0].mxu0
    %v494 = vadd.f32 %v419, %v493
    %v495 = vpop.f32.mrb[0].mxu0
    %v496 = vpop.f32.mrb[0].mxu0
    %v497 = vadd.f32 %v419, %v496
    %v498 = vpop.f32.mrb[0].mxu0
    %499 = vdwg.mxu0
    %v500 = vmax.f32 %v486, 0.0
    %v501 = vmax.f32 %v489, 0.0
    %v502 = vmax.f32 %v494, 0.0
    %v503 = vmax.f32 %v497, 0.0
    %v504 = vpack.c.bf16 %v501, %v500
    %v505 = vpack.c.bf16 %v503, %v502
    %v506 = vld [vmem:[#allocation8] sm:$0xf]
    %v507 = vld [vmem:[#allocation8 + $0x4] sm:$0xf]
    %v508 = vld [vmem:[#allocation8 + $0x8] sm:$0xf]
    %v509 = vld [vmem:[#allocation8 + $0xc] sm:$0xf]
    %v510 = vld [vmem:[#allocation8 + $0x10] sm:$0xf]
    %v511 = vld [vmem:[#allocation8 + $0x14] sm:$0xf]
    %v512 = vld [vmem:[#allocation8 + $0x18] sm:$0xf]
    %v513 = vld [vmem:[#allocation8 + $0x1c] sm:$0xf]
    %v514 = vld [vmem:[#allocation8 + $0x20] sm:$0xf]
    %v515 = vld [vmem:[#allocation8 + $0x24] sm:$0xf]
    %v516 = vld [vmem:[#allocation8 + $0x28] sm:$0xf]
    %v517 = vld [vmem:[#allocation8 + $0x2c] sm:$0xf]
    %v518 = vld [vmem:[#allocation8 + $0x30] sm:$0xf]
    %v519 = vld [vmem:[#allocation8 + $0x34] sm:$0xf]
    %v520 = vld [vmem:[#allocation8 + $0x38] sm:$0xf]
    %v521 = vld [vmem:[#allocation8 + $0x3c] sm:$0xf]
    %v522 = vld [vmem:[%s12] sm:$0x1]
    %v524 = vlaneseq
    %v525 = vshrl.u32 %v524, 7
    %v526 = vsub.s32 0, %v525
    %v527 = vrot.slane %v522, %v526
    %v545 = vunpack.c.l.b16 %v506
    %v546 = vunpack.c.l.b16 %v507
    %v547 = vunpack.c.l.b16 %v508
    %v548 = vunpack.c.l.b16 %v509
    %v549 = vunpack.c.l.b16 %v510
    %v550 = vunpack.c.l.b16 %v511
    %v551 = vunpack.c.l.b16 %v512
    %v552 = vunpack.c.l.b16 %v513
    %v553 = vunpack.c.l.b16 %v514
    %v554 = vunpack.c.l.b16 %v515
    %v555 = vunpack.c.l.b16 %v516
    %v556 = vunpack.c.l.b16 %v517
    %v557 = vunpack.c.l.b16 %v518
    %v558 = vunpack.c.l.b16 %v519
    %v559 = vunpack.c.l.b16 %v520
    %v560 = vunpack.c.l.b16 %v521
    %v561 = vpack.c.b16 %v546, %v545
    %v562 = vpack.c.b16 %v548, %v547
    %v563 = vpack.c.b16 %v550, %v549
    %v564 = vpack.c.b16 %v552, %v551
    %v565 = vpack.c.b16 %v554, %v553
    %v566 = vpack.c.b16 %v556, %v555
    %v567 = vpack.c.b16 %v558, %v557
    %v568 = vpack.c.b16 %v560, %v559
    %577 = vmatprep.subr.bf16.mxu0 0
    %578 = vmatpush1.bf16.msra.mxu0 %v561
    %579 = vmatprep.subr.bf16.mxu0 0
    %580 = vmatpush1.bf16.msra.mxu0 %v562
    %581 = vmatprep.subr.bf16.mxu0 0
    %582 = vmatpush1.bf16.msra.mxu0 %v563
    %583 = vmatprep.subr.bf16.mxu0 0
    %584 = vmatpush1.bf16.msra.mxu0 %v564
    %585 = vmatprep.subr.bf16.mxu0 0
    %586 = vmatpush1.bf16.msra.mxu0 %v565
    %587 = vmatprep.subr.bf16.mxu0 0
    %588 = vmatpush1.bf16.msra.mxu0 %v566
    %589 = vmatprep.subr.bf16.mxu0 0
    %590 = vmatpush1.bf16.msra.mxu0 %v567
    %591 = vmatprep.subr.bf16.mxu0 0
    %592 = vmatpush1.bf16.msra.mxu0 %v568
    %593 = vmatprep.subr.bf16.mxu0 0
    %594 = vmatpush1.bf16.msra.mxu0 0
    %595 = vmatprep.subr.bf16.mxu0 0
    %596 = vmatpush1.bf16.msra.mxu0 0
    %597 = vmatprep.subr.bf16.mxu0 0
    %598 = vmatpush1.bf16.msra.mxu0 0
    %599 = vmatprep.subr.bf16.mxu0 0
    %600 = vmatpush1.bf16.msra.mxu0 0
    %601 = vmatprep.subr.bf16.mxu0 0
    %602 = vmatpush1.bf16.msra.mxu0 0
    %603 = vmatprep.subr.bf16.mxu0 0
    %604 = vmatpush1.bf16.msra.mxu0 0
    %605 = vmatprep.subr.bf16.mxu0 0
    %606 = vmatpush1.bf16.msra.mxu0 0
    %607 = vmatprep.subr.bf16.mxu0 0
    %608 = vmatpush1.bf16.msra.mxu0 0
    %609 = vmatprep.mubr.bf16.mxu0 0
    %610 = vmatmul.mubr.bf16.gmra.mrb[0].mxu0 %v504
    %v611 = vpop.f32.mrb[0].mxu0
    %v612 = vadd.f32 %v527, %v611
    %v613 = vpop.f32.mrb[0].mxu0
    %v614 = vpop.f32.mrb[0].mxu0
    %v615 = vadd.f32 %v527, %v614
    %v616 = vpop.f32.mrb[0].mxu0
    %617 = vmatprep.mubr.bf16.mxu0 0
    %618 = vmatmul.mubr.bf16.gmra.mrb[0].mxu0 %v505
    %v619 = vpop.f32.mrb[0].mxu0
    %v620 = vadd.f32 %v527, %v619
    %v621 = vpop.f32.mrb[0].mxu0
    %v622 = vpop.f32.mrb[0].mxu0
    %v623 = vadd.f32 %v527, %v622
    %v624 = vpop.f32.mrb[0].mxu0
    %625 = vdwg.mxu0
    %v626 = vmax.f32 %v612, 0.0
    %v627 = vmax.f32 %v615, 0.0
    %v628 = vmax.f32 %v620, 0.0
    %v629 = vmax.f32 %v623, 0.0
    %v630 = vpack.c.bf16 %v627, %v626
    %v631 = vpack.c.bf16 %v629, %v628
    %v632 = vld [vmem:[#allocation10] sm:$0xff]
    %v633 = vld [vmem:[#allocation10 + $0x8] sm:$0xff]
    %v634 = vld [vmem:[#allocation10 + $0x10] sm:$0xff]
    %v635 = vld [vmem:[#allocation10 + $0x18] sm:$0xff]
    %v636 = vld [vmem:[#allocation10 + $0x20] sm:$0xff]
    %v637 = vld [vmem:[#allocation10 + $0x28] sm:$0xff]
    %v638 = vld [vmem:[#allocation10 + $0x30] sm:$0xff]
    %v639 = vld [vmem:[#allocation10 + $0x38] sm:$0xff]
    %v640 = vld [vmem:[#allocation10 + $0x40] sm:$0xff]
    %v641 = vld [vmem:[#allocation10 + $0x48] sm:$0xff]
    %v642 = vld [vmem:[#allocation10 + $0x50] sm:$0xff]
    %v643 = vld [vmem:[#allocation10 + $0x58] sm:$0xff]
    %v644 = vld [vmem:[#allocation10 + $0x60] sm:$0xff]
    %v645 = vld [vmem:[#allocation10 + $0x68] sm:$0xff]
    %v646 = vld [vmem:[#allocation10 + $0x70] sm:$0xff]
    %v647 = vld [vmem:[#allocation10 + $0x78] sm:$0xff]
    %v648 = vld [vmem:[%s13] sm:$0x3]
    %v650 = vlaneseq
    %v651 = vshrl.u32 %v650, 7
    %v652 = vsub.s32 0, %v651
    %v653 = vrot.slane %v648, %v652
    %v654 = vlaneseq
    %v655 = vshrl.u32 %v654, 7
    %v656 = vsub.s32 1, %v655
    %v657 = vrot.slane %v648, %v656
    %v676 = vunpack.c.l.b16 %v632
    %v677 = vunpack.c.h.b16 %v632
    %v678 = vunpack.c.l.b16 %v633
    %v679 = vunpack.c.h.b16 %v633
    %v680 = vunpack.c.l.b16 %v634
    %v681 = vunpack.c.h.b16 %v634
    %v682 = vunpack.c.l.b16 %v635
    %v683 = vunpack.c.h.b16 %v635
    %v684 = vunpack.c.l.b16 %v636
    %v685 = vunpack.c.h.b16 %v636
    %v686 = vunpack.c.l.b16 %v637
    %v687 = vunpack.c.h.b16 %v637
    %v688 = vunpack.c.l.b16 %v638
    %v689 = vunpack.c.h.b16 %v638
    %v690 = vunpack.c.l.b16 %v639
    %v691 = vunpack.c.h.b16 %v639
    %v692 = vunpack.c.l.b16 %v640
    %v693 = vunpack.c.h.b16 %v640
    %v694 = vunpack.c.l.b16 %v641
    %v695 = vunpack.c.h.b16 %v641
    %v696 = vunpack.c.l.b16 %v642
    %v697 = vunpack.c.h.b16 %v642
    %v698 = vunpack.c.l.b16 %v643
    %v699 = vunpack.c.h.b16 %v643
    %v700 = vunpack.c.l.b16 %v644
    %v701 = vunpack.c.h.b16 %v644
    %v702 = vunpack.c.l.b16 %v645
    %v703 = vunpack.c.h.b16 %v645
    %v704 = vunpack.c.l.b16 %v646
    %v705 = vunpack.c.h.b16 %v646
    %v706 = vunpack.c.l.b16 %v647
    %v707 = vunpack.c.h.b16 %v647
    %v708 = vpack.c.b16 %v678, %v676
    %v709 = vpack.c.b16 %v679, %v677
    %v710 = vpack.c.b16 %v682, %v680
    %v711 = vpack.c.b16 %v683, %v681
    %v712 = vpack.c.b16 %v686, %v684
    %v713 = vpack.c.b16 %v687, %v685
    %v714 = vpack.c.b16 %v690, %v688
    %v715 = vpack.c.b16 %v691, %v689
    %v716 = vpack.c.b16 %v694, %v692
    %v717 = vpack.c.b16 %v695, %v693
    %v718 = vpack.c.b16 %v698, %v696
    %v719 = vpack.c.b16 %v699, %v697
    %v720 = vpack.c.b16 %v702, %v700
    %v721 = vpack.c.b16 %v703, %v701
    %v722 = vpack.c.b16 %v706, %v704
    %v723 = vpack.c.b16 %v707, %v705
    %740 = vmatprep.subr.bf16.mxu0 %v709
    %741 = vmatpush1.bf16.msra.mxu0 %v708
    %742 = vmatprep.subr.bf16.mxu0 %v711
    %743 = vmatpush1.bf16.msra.mxu0 %v710
    %744 = vmatprep.subr.bf16.mxu0 %v713
    %745 = vmatpush1.bf16.msra.mxu0 %v712
    %746 = vmatprep.subr.bf16.mxu0 %v715
    %747 = vmatpush1.bf16.msra.mxu0 %v714
    %748 = vmatprep.subr.bf16.mxu0 %v717
    %749 = vmatpush1.bf16.msra.mxu0 %v716
    %750 = vmatprep.subr.bf16.mxu0 %v719
    %751 = vmatpush1.bf16.msra.mxu0 %v718
    %752 = vmatprep.subr.bf16.mxu0 %v721
    %753 = vmatpush1.bf16.msra.mxu0 %v720
    %754 = vmatprep.subr.bf16.mxu0 %v723
    %755 = vmatpush1.bf16.msra.mxu0 %v722
    %756 = vmatprep.subr.bf16.mxu0 0
    %757 = vmatpush1.bf16.msra.mxu0 0
    %758 = vmatprep.subr.bf16.mxu0 0
    %759 = vmatpush1.bf16.msra.mxu0 0
    %760 = vmatprep.subr.bf16.mxu0 0
    %761 = vmatpush1.bf16.msra.mxu0 0
    %762 = vmatprep.subr.bf16.mxu0 0
    %763 = vmatpush1.bf16.msra.mxu0 0
    %764 = vmatprep.subr.bf16.mxu0 0
    %765 = vmatpush1.bf16.msra.mxu0 0
    %766 = vmatprep.subr.bf16.mxu0 0
    %767 = vmatpush1.bf16.msra.mxu0 0
    %768 = vmatprep.subr.bf16.mxu0 0
    %769 = vmatpush1.bf16.msra.mxu0 0
    %770 = vmatprep.subr.bf16.mxu0 0
    %771 = vmatpush1.bf16.msra.mxu0 0
    %772 = vmatprep.mubr.bf16.mxu0 0
    %773 = vmatmul.mubr.bf16.gmra.mrb[0].mxu0 %v630
    %v774 = vpop.f32.mrb[0].mxu0
    %v775 = vadd.f32 %v653, %v774
    %v776 = vpop.f32.mrb[0].mxu0
    %v777 = vadd.f32 %v657, %v776
    %v778 = vpop.f32.mrb[0].mxu0
    %v779 = vadd.f32 %v653, %v778
    %v780 = vpop.f32.mrb[0].mxu0
    %v781 = vadd.f32 %v657, %v780
    %782 = vmatprep.mubr.bf16.mxu0 0
    %783 = vmatmul.mubr.bf16.gmra.mrb[0].mxu0 %v631
    %v784 = vpop.f32.mrb[0].mxu0
    %v785 = vadd.f32 %v653, %v784
    %v786 = vpop.f32.mrb[0].mxu0
    %v787 = vadd.f32 %v657, %v786
    %v788 = vpop.f32.mrb[0].mxu0
    %v789 = vadd.f32 %v653, %v788
    %v790 = vpop.f32.mrb[0].mxu0
    %v791 = vadd.f32 %v657, %v790
    %792 = vdwg.mxu0
    %v793 = vmax.f32 %v775, 0.0
    %v794 = vmax.f32 %v777, 0.0
    %v795 = vmax.f32 %v779, 0.0
    %v796 = vmax.f32 %v781, 0.0
    %v797 = vmax.f32 %v785, 0.0
    %v798 = vmax.f32 %v787, 0.0
    %v799 = vmax.f32 %v789, 0.0
    %v800 = vmax.f32 %v791, 0.0
    %v801 = vpack.c.bf16 %v795, %v793
    %v802 = vpack.c.bf16 %v796, %v794
    %v803 = vpack.c.bf16 %v799, %v797
    %v804 = vpack.c.bf16 %v800, %v798
    %v805 = vld [vmem:[#allocation11] sm:$0xf]
    %v806 = vld [vmem:[#allocation11 + $0x4] sm:$0xf]
    %v807 = vld [vmem:[#allocation11 + $0x8] sm:$0xf]
    %v808 = vld [vmem:[#allocation11 + $0xc] sm:$0xf]
    %v809 = vld [vmem:[#allocation11 + $0x10] sm:$0xf]
    %v810 = vld [vmem:[#allocation11 + $0x14] sm:$0xf]
    %v811 = vld [vmem:[#allocation11 + $0x18] sm:$0xf]
    %v812 = vld [vmem:[#allocation11 + $0x1c] sm:$0xf]
    %v813 = vld [vmem:[#allocation11 + $0x20] sm:$0xf]
    %v814 = vld [vmem:[#allocation11 + $0x24] sm:$0xf]
    %v815 = vld [vmem:[#allocation11 + $0x28] sm:$0xf]
    %v816 = vld [vmem:[#allocation11 + $0x2c] sm:$0xf]
    %v817 = vld [vmem:[#allocation11 + $0x30] sm:$0xf]
    %v818 = vld [vmem:[#allocation11 + $0x34] sm:$0xf]
    %v819 = vld [vmem:[#allocation11 + $0x38] sm:$0xf]
    %v820 = vld [vmem:[#allocation11 + $0x3c] sm:$0xf]
    %v821 = vld [vmem:[#allocation11 + $0x40] sm:$0xf]
    %v822 = vld [vmem:[#allocation11 + $0x44] sm:$0xf]
    %v823 = vld [vmem:[#allocation11 + $0x48] sm:$0xf]
    %v824 = vld [vmem:[#allocation11 + $0x4c] sm:$0xf]
    %v825 = vld [vmem:[#allocation11 + $0x50] sm:$0xf]
    %v826 = vld [vmem:[#allocation11 + $0x54] sm:$0xf]
    %v827 = vld [vmem:[#allocation11 + $0x58] sm:$0xf]
    %v828 = vld [vmem:[#allocation11 + $0x5c] sm:$0xf]
    %v829 = vld [vmem:[#allocation11 + $0x60] sm:$0xf]
    %v830 = vld [vmem:[#allocation11 + $0x64] sm:$0xf]
    %v831 = vld [vmem:[#allocation11 + $0x68] sm:$0xf]
    %v832 = vld [vmem:[#allocation11 + $0x6c] sm:$0xf]
    %v833 = vld [vmem:[#allocation11 + $0x70] sm:$0xf]
    %v834 = vld [vmem:[#allocation11 + $0x74] sm:$0xf]
    %v835 = vld [vmem:[#allocation11 + $0x78] sm:$0xf]
    %v836 = vld [vmem:[#allocation11 + $0x7c] sm:$0xf]
    %v837 = vld [vmem:[%s14] sm:$0x1]
    %v839 = vlaneseq
    %v840 = vshrl.u32 %v839, 7
    %v841 = vsub.s32 0, %v840
    %v842 = vrot.slane %v837, %v841
    %v876 = vunpack.c.l.b16 %v805
    %v877 = vunpack.c.l.b16 %v806
    %v878 = vunpack.c.l.b16 %v807
    %v879 = vunpack.c.l.b16 %v808
    %v880 = vunpack.c.l.b16 %v809
    %v881 = vunpack.c.l.b16 %v810
    %v882 = vunpack.c.l.b16 %v811
    %v883 = vunpack.c.l.b16 %v812
    %v884 = vunpack.c.l.b16 %v813
    %v885 = vunpack.c.l.b16 %v814
    %v886 = vunpack.c.l.b16 %v815
    %v887 = vunpack.c.l.b16 %v816
    %v888 = vunpack.c.l.b16 %v817
    %v889 = vunpack.c.l.b16 %v818
    %v890 = vunpack.c.l.b16 %v819
    %v891 = vunpack.c.l.b16 %v820
    %v892 = vunpack.c.l.b16 %v821
    %v893 = vunpack.c.l.b16 %v822
    %v894 = vunpack.c.l.b16 %v823
    %v895 = vunpack.c.l.b16 %v824
    %v896 = vunpack.c.l.b16 %v825
    %v897 = vunpack.c.l.b16 %v826
    %v898 = vunpack.c.l.b16 %v827
    %v899 = vunpack.c.l.b16 %v828
    %v900 = vunpack.c.l.b16 %v829
    %v901 = vunpack.c.l.b16 %v830
    %v902 = vunpack.c.l.b16 %v831
    %v903 = vunpack.c.l.b16 %v832
    %v904 = vunpack.c.l.b16 %v833
    %v905 = vunpack.c.l.b16 %v834
    %v906 = vunpack.c.l.b16 %v835
    %v907 = vunpack.c.l.b16 %v836
    %v908 = vpack.c.b16 %v877, %v876
    %v909 = vpack.c.b16 %v879, %v878
    %v910 = vpack.c.b16 %v881, %v880
    %v911 = vpack.c.b16 %v883, %v882
    %v912 = vpack.c.b16 %v885, %v884
    %v913 = vpack.c.b16 %v887, %v886
    %v914 = vpack.c.b16 %v889, %v888
    %v915 = vpack.c.b16 %v891, %v890
    %v916 = vpack.c.b16 %v893, %v892
    %v917 = vpack.c.b16 %v895, %v894
    %v918 = vpack.c.b16 %v897, %v896
    %v919 = vpack.c.b16 %v899, %v898
    %v920 = vpack.c.b16 %v901, %v900
    %v921 = vpack.c.b16 %v903, %v902
    %v922 = vpack.c.b16 %v905, %v904
    %v923 = vpack.c.b16 %v907, %v906
    %940 = vmatprep.subr.bf16.mxu0 0
    %941 = vmatpush1.bf16.msra.mxu0 %v908
    %942 = vmatprep.subr.bf16.mxu0 0
    %943 = vmatpush1.bf16.msra.mxu0 %v909
    %944 = vmatprep.subr.bf16.mxu0 0
    %945 = vmatpush1.bf16.msra.mxu0 %v910
    %946 = vmatprep.subr.bf16.mxu0 0
    %947 = vmatpush1.bf16.msra.mxu0 %v911
    %948 = vmatprep.subr.bf16.mxu0 0
    %949 = vmatpush1.bf16.msra.mxu0 %v912
    %950 = vmatprep.subr.bf16.mxu0 0
    %951 = vmatpush1.bf16.msra.mxu0 %v913
    %952 = vmatprep.subr.bf16.mxu0 0
    %953 = vmatpush1.bf16.msra.mxu0 %v914
    %954 = vmatprep.subr.bf16.mxu0 0
    %955 = vmatpush1.bf16.msra.mxu0 %v915
    %956 = vmatprep.subr.bf16.mxu0 0
    %957 = vmatpush1.bf16.msra.mxu0 %v916
    %958 = vmatprep.subr.bf16.mxu0 0
    %959 = vmatpush1.bf16.msra.mxu0 %v917
    %960 = vmatprep.subr.bf16.mxu0 0
    %961 = vmatpush1.bf16.msra.mxu0 %v918
    %962 = vmatprep.subr.bf16.mxu0 0
    %963 = vmatpush1.bf16.msra.mxu0 %v919
    %964 = vmatprep.subr.bf16.mxu0 0
    %965 = vmatpush1.bf16.msra.mxu0 %v920
    %966 = vmatprep.subr.bf16.mxu0 0
    %967 = vmatpush1.bf16.msra.mxu0 %v921
    %968 = vmatprep.subr.bf16.mxu0 0
    %969 = vmatpush1.bf16.msra.mxu0 %v922
    %970 = vmatprep.subr.bf16.mxu0 0
    %971 = vmatpush1.bf16.msra.mxu0 %v923
    %972 = vmatprep.mubr.bf16.mxu0 %v802
    %973 = vmatmul.mubr.bf16.gmra.mrb[0].mxu0 %v801
    %v974 = vpop.f32.mrb[0].mxu0
    %v975 = vadd.f32 %v842, %v974
    %v976 = vpop.f32.mrb[0].mxu0
    %v977 = vpop.f32.mrb[0].mxu0
    %v978 = vadd.f32 %v842, %v977
    %v979 = vpop.f32.mrb[0].mxu0
    %980 = vmatprep.mubr.bf16.mxu0 %v804
    %981 = vmatmul.mubr.bf16.gmra.mrb[0].mxu0 %v803
    %v982 = vpop.f32.mrb[0].mxu0
    %v983 = vadd.f32 %v842, %v982
    %v984 = vpop.f32.mrb[0].mxu0
    %v985 = vpop.f32.mrb[0].mxu0
    %v986 = vadd.f32 %v842, %v985
    %v987 = vpop.f32.mrb[0].mxu0
    %988 = vdwg.mxu0
    %v989 = vmax.f32 %v975, 0.0
    %v990 = vmax.f32 %v978, 0.0
    %v991 = vmax.f32 %v983, 0.0
    %v992 = vmax.f32 %v986, 0.0
    %993 = vst [vmem:[#allocation13] sm:$0xff] %v989
    %994 = vst [vmem:[#allocation13 + $0x8] sm:$0xff] %v990
    %995 = vst [vmem:[#allocation13 + $0x10] sm:$0xff] %v991
    %996 = vst [vmem:[#allocation13 + $0x18] sm:$0xff] %v992
    // Predicated region
    $region86: #{tpu_custom_call.1} parent=1 // pred_check
      _
    $region87: #{tpu_custom_call.1} parent=1 // pred_check_branch
      %998 = sbr.rel (0) target = $region89
    $region88: #{tpu_custom_call.1} parent=1 // pred_region
      %s1000 = ssub.s32 512, 512
      %1001 = vsyncadd [#allocation4], %s1000
      %s1002 = sshll.u32 [#allocation13], 4
      %s1003 = int_to_ptr.vmem [resolvable:$true] %s1002
      %1008 = dma.vmem_to_hbm [thread:$0]  %s1003, 512, %s15, [#allocation4], 128, 128, 8
    $region89: #{tpu_custom_call.1} parent=1 // pred_fallthru
      _
    // Predicated region
    $region90: #{tpu_custom_call.1} parent=1 // pred_check
      _
    $region91: #{tpu_custom_call.1} parent=1 // pred_check_branch
      %1010 = sbr.rel (0) target = $region93
    $region92: #{tpu_custom_call.1} parent=1 // pred_region
      %1011 = dma.done [#allocation4], 512
    $region93: #{tpu_custom_call.1} parent=1 // pred_fallthru
      _
    %1012 = vsyncpa [#allocation3], 1
    %1013 = vsyncpa [#allocation6], 1
    %1014 = vsyncpa [#allocation9], 1
    %1015 = vsyncpa [#allocation12], 1
    %1016 = vsyncpa [#allocation4], 1

</llo_original>
